<compile_context>
chip_gen: v5e
topology: v5e:2x2
jax: 0.10.0
libtpu: 0.0.40
codegen_flags: <defaults>
</compile_context>

<pallas_src>
import functools
import math

import jax
import jax.numpy as jnp
from jax import lax
from jax.experimental import pallas as pl
from jax.experimental.pallas import tpu as pltpu


_COMPILER_PARAMS = pltpu.CompilerParams(vmem_limit_bytes=32 * 1024 * 1024)


def _vmem_specs(n):
    return [pl.BlockSpec(memory_space=pltpu.MemorySpace.VMEM) for _ in range(n)]


# ---------------------------------------------------------------------------
# Kernels
# ---------------------------------------------------------------------------
def linear_relu_kernel(x_ref, w_ref, b_ref, o_ref):
    y = jnp.dot(x_ref[...], w_ref[...], preferred_element_type=jnp.float32)
    o_ref[...] = jnp.maximum(y + b_ref[...], 0.0).astype(o_ref.dtype)


def convt_bn_relu_kernel(p_ref, w_ref, mask_ref, rmat_ref, g_ref, b_ref, o_ref,
                         *, inv_count):
    # One fat matmul: rows = N*(H+1)*(W+1) patch positions, K = 4*Cin,
    # lanes = 4 sub-pixel phases * Cout.
    z = jnp.dot(p_ref[...], w_ref[...], preferred_element_type=jnp.float32)
    m = mask_ref[...]        # 1.0 where (row, phase) maps to a real output pixel
    # BatchNorm2d training-mode stats over (N, OH, OW) per channel.  The
    # cross-phase per-channel reduction is a tiny matmul against a 0/1 matrix,
    # avoiding any in-kernel lane<->sublane relayout.  Conv bias omitted: it is
    # exactly cancelled by the mean subtraction.
    s = jnp.sum(z * m, axis=0, keepdims=True)                         # (1, 4*Cout)
    mean = jnp.dot(s, rmat_ref[...],
                   preferred_element_type=jnp.float32) * inv_count
    d = (z - mean) * m
    ss = jnp.sum(d * d, axis=0, keepdims=True)
    var = jnp.dot(ss, rmat_ref[...],
                  preferred_element_type=jnp.float32) * inv_count
    y = (z - mean) * lax.rsqrt(var + 1e-5) * g_ref[...] + b_ref[...]
    o_ref[...] = jnp.maximum(y, 0.0).astype(o_ref.dtype)


def convt_tanh_kernel(p_ref, w_ref, b_ref, o_ref):
    z = jnp.dot(p_ref[...], w_ref[...], preferred_element_type=jnp.float32)
    o_ref[...] = jnp.tanh(z + b_ref[...])


# ---------------------------------------------------------------------------
# Host-side parameter prep (hoisted to __init__, runs once)
# ---------------------------------------------------------------------------
def _prep_convt_weight(wt):
    """(Cin, Cout, 4, 4) PyTorch ConvTranspose2d weight -> (4*Cin, 4*Cout)
    phase-stacked direct-conv weight:
        W[(dh,dw,ci), (ph,pw,co)] = wt[ci, co, 3-ph-2*dh, 3-pw-2*dw]."""
    cin, cout = wt.shape[0], wt.shape[1]
    wf = wt[:, :, ::-1, ::-1]                        # reverse kh, kw
    wf = wf.reshape(cin, cout, 2, 2, 2, 2)           # (ci, co, dh, ph, dw, pw)
    wst = jnp.transpose(wf, (2, 4, 0, 3, 5, 1))      # (dh, dw, ci, ph, pw, co)
    return wst.reshape(4 * cin, 4 * cout)


def _phase_valid_mask(h, w, cout):
    """((h+1)*(w+1), 4*cout) f32 mask: 1 where patch position (r, c) and phase
    (ph, pw) correspond to a real output pixel (gives exact BN statistics)."""
    r = jnp.arange(h + 1)[:, None, None]
    c = jnp.arange(w + 1)[None, :, None]
    ph = jnp.array([0, 0, 1, 1])[None, None, :]
    pw = jnp.array([0, 1, 0, 1])[None, None, :]
    valid = ((r - ph) >= 0) & ((r - ph) <= h - 1) & \
            ((c - pw) >= 0) & ((c - pw) <= w - 1)               # (h+1, w+1, 4)
    m = jnp.broadcast_to(valid[..., None], (h + 1, w + 1, 4, cout))
    return m.reshape((h + 1) * (w + 1), 4 * cout).astype(jnp.float32)


def _chunk_reduce_matrix(cout):
    """(4*cout, 4*cout) 0/1 matrix: sums the 4 phase chunks per channel and
    broadcasts the sum back to every chunk lane."""
    idx = jnp.arange(4 * cout)
    return (idx[:, None] % cout == idx[None, :] % cout).astype(jnp.float32)


# ---------------------------------------------------------------------------
# Wrapper glue (runs under jit, around the pallas_calls)
# ---------------------------------------------------------------------------
def _im2col_2x2(x):
    """(N, H, W, C) -> (N*(H+1)*(W+1), 4*C): 2x2 patches of the 1-padded input."""
    n, h, w, c = x.shape
    xp = jnp.pad(x, ((0, 0), (1, 1), (1, 1), (0, 0)))
    taps = [xp[:, dh:dh + h + 1, dw:dw + w + 1, :]
            for dh in (0, 1) for dw in (0, 1)]
    p = jnp.stack(taps, axis=3)                      # (N, H+1, W+1, 4, C)
    return p.reshape(n * (h + 1) * (w + 1), 4 * c)


def _uninterleave_phases(z, n, h, w, cout):
    """(N*(H+1)*(W+1), 4*cout) phase-stacked conv output -> (N, 2H, 2W, cout)."""
    zr = z.reshape(n, h + 1, w + 1, 2, 2, cout)
    p00 = zr[:, :h, :w, 0, 0, :]
    p01 = zr[:, :h, 1:, 0, 1, :]
    p10 = zr[:, 1:, :w, 1, 0, :]
    p11 = zr[:, 1:, 1:, 1, 1, :]
    a = jnp.stack([jnp.stack([p00, p01], axis=3),
                   jnp.stack([p10, p11], axis=3)], axis=2)   # (N, H, 2, W, 2, C)
    return a.reshape(n, 2 * h, 2 * w, cout)


def linear_relu(noise, w_bf16, b_f32):
    b, nout = noise.shape[0], w_bf16.shape[1]
    return pl.pallas_call(
        linear_relu_kernel,
        out_shape=jax.ShapeDtypeStruct((b, nout), jnp.bfloat16),
        in_specs=_vmem_specs(3),
        out_specs=pl.BlockSpec(memory_space=pltpu.MemorySpace.VMEM),
        compiler_params=_COMPILER_PARAMS,
    )(noise.astype(jnp.bfloat16), w_bf16, b_f32)


def convt_bn_relu_block(x, layer):
    n, h, w, _ = x.shape
    cout = layer["cout"]
    p2 = _im2col_2x2(x)
    mask = jnp.tile(layer["mask_base"], (n, 1))
    rows = p2.shape[0]
    inv_count = 1.0 / float(4 * n * h * w)           # == 1 / (N * OH * OW)
    z = pl.pallas_call(
        functools.partial(convt_bn_relu_kernel, inv_count=inv_count),
        out_shape=jax.ShapeDtypeStruct((rows, 4 * cout), jnp.bfloat16),
        in_specs=_vmem_specs(6),
        out_specs=pl.BlockSpec(memory_space=pltpu.MemorySpace.VMEM),
        compiler_params=_COMPILER_PARAMS,
    )(p2, layer["w"], mask, layer["rmat"], layer["gamma4"], layer["beta4"])
    return _uninterleave_phases(z, n, h, w, cout)


def convt_tanh_block(x, layer):
    n, h, w, _ = x.shape
    cout = layer["cout"]
    p2 = _im2col_2x2(x)
    rows = p2.shape[0]
    z = pl.pallas_call(
        convt_tanh_kernel,
        out_shape=jax.ShapeDtypeStruct((rows, 4 * cout), jnp.float32),
        in_specs=_vmem_specs(3),
        out_specs=pl.BlockSpec(memory_space=pltpu.MemorySpace.VMEM),
        compiler_params=_COMPILER_PARAMS,
    )(p2, layer["w"], layer["bias4"])
    return _uninterleave_phases(z, n, h, w, cout)


# ---------------------------------------------------------------------------
# Generator (mirrors the PyTorch module; deterministic in-script init)
# ---------------------------------------------------------------------------
class GeneratorPallas:
    def __init__(self, key, noise_dim=16, output_channels=3, H=16, W=16,
                 feature_maps=32):
        self.noise_dim = noise_dim
        self.output_channels = output_channels
        self.H, self.W = H, W
        self.feature_maps = feature_maps
        self._start = 4
        self.upsample_steps = int(math.log2(max(H, W)) - math.log2(self._start)) - 1

        keys = list(jax.random.split(key, 2 + 2 * (self.upsample_steps + 1)))
        ki = iter(keys)

        # Linear(noise_dim, fm*4*4); columns permuted (ch,h,w)->(h,w,ch) at init
        # so the post-linear view + NCHW->NHWC transpose disappears.
        bound = 1.0 / math.sqrt(noise_dim)
        lw = jax.random.uniform(next(ki), (noise_dim, feature_maps * 16),
                                minval=-bound, maxval=bound, dtype=jnp.float32)
        lb = jax.random.uniform(next(ki), (feature_maps * 16,),
                                minval=-bound, maxval=bound, dtype=jnp.float32)
        self.lin_w = (lw.reshape(noise_dim, feature_maps, 4, 4)
                        .transpose(0, 2, 3, 1)
                        .reshape(noise_dim, -1).astype(jnp.bfloat16))
        self.lin_b = (lb.reshape(feature_maps, 4, 4)
                        .transpose(1, 2, 0).reshape(1, -1))             # f32

        # Hidden ConvTranspose2d + BN + ReLU blocks
        self.hidden = []
        in_ch, size = feature_maps, self._start
        for i in range(self.upsample_steps):
            out_ch = max(feature_maps // 2 ** (i + 1), output_channels)
            bound = 1.0 / math.sqrt(in_ch * 16)
            wt = jax.random.uniform(next(ki), (in_ch, out_ch, 4, 4),
                                    minval=-bound, maxval=bound,
                                    dtype=jnp.float32)
            _ = jax.random.uniform(next(ki), (out_ch,), minval=-bound,
                                   maxval=bound, dtype=jnp.float32)
            # ^ ConvT bias drawn for parameter parity but unused: it is exactly
            #   cancelled by the BatchNorm mean subtraction.
            gamma = jnp.ones((out_ch,), jnp.float32)
            beta = jnp.zeros((out_ch,), jnp.float32)
            self.hidden.append(dict(
                cout=out_ch,
                w=_prep_convt_weight(wt).astype(jnp.bfloat16),
                mask_base=_phase_valid_mask(size, size, out_ch),
                rmat=_chunk_reduce_matrix(out_ch),
                gamma4=jnp.tile(gamma, 4).reshape(1, -1),
                beta4=jnp.tile(beta, 4).reshape(1, -1),
            ))
            in_ch, size = out_ch, size * 2

        # Final ConvTranspose2d + Tanh
        bound = 1.0 / math.sqrt(in_ch * 16)
        wt = jax.random.uniform(next(ki), (in_ch, output_channels, 4, 4),
                                minval=-bound, maxval=bound, dtype=jnp.float32)
        bb = jax.random.uniform(next(ki), (output_channels,),
                                minval=-bound, maxval=bound, dtype=jnp.float32)
        self.final = dict(
            cout=output_channels,
            w=_prep_convt_weight(wt).astype(jnp.bfloat16),
            bias4=jnp.tile(bb, 4).reshape(1, -1),
        )

        self._fwd = jax.jit(self._forward_impl)

    def _forward_impl(self, noise):
        b = noise.shape[0]
        x = linear_relu(noise, self.lin_w, self.lin_b)   # (B, 16*fm) bf16, NHWC order
        x = x.reshape(b, self._start, self._start, self.feature_maps)
        for layer in self.hidden:
            x = convt_bn_relu_block(x, layer)            # (B, 2H, 2W, Cout) bf16
        x = convt_tanh_block(x, self.final)              # (B, H, W, out_ch) f32
        return jnp.transpose(x, (0, 3, 1, 2))            # -> NCHW

    def __call__(self, noise):
        x = self._fwd(noise)
        assert x.shape[2] == self.H and x.shape[3] == self.W, (
            f"Output size {x.shape[2:]} does not match expected "
            f"size ({self.H}, {self.W})")
        return x


if __name__ == "__main__":
    key = jax.random.PRNGKey(0)
    pkey, nkey = jax.random.split(key)

    # Small config consistent with the module: noise_dim=16, 3 output channels,
    # H=W=16, feature_maps=32 -> upsample_steps=1, batch=2.
    gen = GeneratorPallas(pkey, noise_dim=16, output_channels=3,
                          H=16, W=16, feature_maps=32)
    noise = jax.random.normal(nkey, (2, 16), dtype=jnp.float32)

    out = jax.block_until_ready(gen(noise))
    assert out.shape == (2, 3, 16, 16)
    assert bool(jnp.all(jnp.isfinite(out)))
    assert bool(jnp.all(jnp.abs(out) <= 1.0))   # tanh output range
    print("KERNEL_OK")
</pallas_src>

<mosaic_0001>
module attributes {stable_mosaic.version = 11 : i64} {
  func.func @linear_relu_kernel(%arg0: memref<2x16xbf16, #tpu.memory_space<vmem>>, %arg1: memref<16x512xbf16, #tpu.memory_space<vmem>>, %arg2: memref<1x512xf32, #tpu.memory_space<vmem>>, %arg3: memref<2x512xbf16, #tpu.memory_space<vmem>>) attributes {dimension_semantics = [], scalar_prefetch = 0 : i64, scratch_operands = 0 : i64, tpu.core_type = #tpu.core_type<tc>} {
    %c0 = arith.constant 0 : index
    %c0_0 = arith.constant 0 : index
    %0 = vector.load %arg0[%c0, %c0_0] : memref<2x16xbf16, #tpu.memory_space<vmem>>, vector<2x16xbf16>
    %c0_1 = arith.constant 0 : index
    %c0_2 = arith.constant 0 : index
    %1 = vector.load %arg1[%c0_1, %c0_2] : memref<16x512xbf16, #tpu.memory_space<vmem>>, vector<16x512xbf16>
    %cst = arith.constant dense<0.000000e+00> : vector<2x512xf32>
    %2 = tpu.matmul %0, %1, %cst {dimension_numbers = #tpu.dot_dimension_numbers<[1], [0], [0], [1], [0, 0, 1, 1], [], []>} : vector<2x16xbf16>, vector<16x512xbf16>, vector<2x512xf32> -> vector<2x512xf32>
    %c0_3 = arith.constant 0 : index
    %c0_4 = arith.constant 0 : index
    %3 = vector.load %arg2[%c0_3, %c0_4] : memref<1x512xf32, #tpu.memory_space<vmem>>, vector<1x512xf32>
    %4 = vector.broadcast %3 : vector<1x512xf32> to vector<2x512xf32>
    %5 = arith.addf %2, %4 : vector<2x512xf32>
    %cst_5 = arith.constant 0.000000e+00 : f32
    %6 = vector.broadcast %cst_5 : f32 to vector<2x512xf32>
    %7 = arith.maximumf %5, %6 : vector<2x512xf32>
    %8 = arith.truncf %7 : vector<2x512xf32> to vector<2x512xbf16>
    %c0_6 = arith.constant 0 : index
    %c0_7 = arith.constant 0 : index
    %9 = vector.load %arg3[%c0_6, %c0_7] : memref<2x512xbf16, #tpu.memory_space<vmem>>, vector<2x512xbf16>
    tpu.vector_store %arg3[%c0_6, %c0_7], %8 {strides = array<i32>} : memref<2x512xbf16, #tpu.memory_space<vmem>>, vector<2x512xbf16>,
    return
  }
}

module attributes {stable_mosaic.version = 11 : i64} {
  func.func @convt_bn_relu_kernel(%arg0: memref<50x128xbf16, #tpu.memory_space<vmem>>, %arg1: memref<128x64xbf16, #tpu.memory_space<vmem>>, %arg2: memref<50x64xf32, #tpu.memory_space<vmem>>, %arg3: memref<64x64xf32, #tpu.memory_space<vmem>>, %arg4: memref<1x64xf32, #tpu.memory_space<vmem>>, %arg5: memref<1x64xf32, #tpu.memory_space<vmem>>, %arg6: memref<50x64xbf16, #tpu.memory_space<vmem>>) attributes {dimension_semantics = [], scalar_prefetch = 0 : i64, scratch_operands = 0 : i64, tpu.core_type = #tpu.core_type<tc>} {
    %c0 = arith.constant 0 : index
    %c0_0 = arith.constant 0 : index
    %0 = vector.load %arg0[%c0, %c0_0] : memref<50x128xbf16, #tpu.memory_space<vmem>>, vector<50x128xbf16>
    %c0_1 = arith.constant 0 : index
    %c0_2 = arith.constant 0 : index
    %1 = vector.load %arg1[%c0_1, %c0_2] : memref<128x64xbf16, #tpu.memory_space<vmem>>, vector<128x64xbf16>
    %cst = arith.constant dense<0.000000e+00> : vector<50x64xf32>
    %2 = tpu.matmul %0, %1, %cst {dimension_numbers = #tpu.dot_dimension_numbers<[1], [0], [0], [1], [0, 0, 1, 1], [], []>} : vector<50x128xbf16>, vector<128x64xbf16>, vector<50x64xf32> -> vector<50x64xf32>
    %c0_3 = arith.constant 0 : index
    %c0_4 = arith.constant 0 : index
    %3 = vector.load %arg2[%c0_3, %c0_4] : memref<50x64xf32, #tpu.memory_space<vmem>>, vector<50x64xf32>
    %4 = arith.mulf %2, %3 : vector<50x64xf32>
    %cst_5 = arith.constant dense<0.000000e+00> : vector<64xf32>
    %5 = vector.multi_reduction <add>, %4, %cst_5 [0] : vector<50x64xf32> to vector<64xf32>
    %6 = vector.shape_cast %5 : vector<64xf32> to vector<1x64xf32>
    %c0_6 = arith.constant 0 : index
    %c0_7 = arith.constant 0 : index
    %7 = vector.load %arg3[%c0_6, %c0_7] : memref<64x64xf32, #tpu.memory_space<vmem>>, vector<64x64xf32>
    %cst_8 = arith.constant dense<0.000000e+00> : vector<1x64xf32>
    %8 = tpu.matmul %6, %7, %cst_8 {dimension_numbers = #tpu.dot_dimension_numbers<[1], [0], [0], [1], [0, 0, 1, 1], [], []>} : vector<1x64xf32>, vector<64x64xf32>, vector<1x64xf32> -> vector<1x64xf32>
    %cst_9 = arith.constant 7.812500e-03 : f32
    %9 = vector.broadcast %cst_9 : f32 to vector<1x64xf32>
    %10 = arith.mulf %8, %9 : vector<1x64xf32>
    %11 = vector.broadcast %10 : vector<1x64xf32> to vector<50x64xf32>
    %12 = arith.subf %2, %11 : vector<50x64xf32>
    %13 = arith.mulf %12, %3 : vector<50x64xf32>
    %14 = arith.mulf %13, %13 : vector<50x64xf32>
    %cst_10 = arith.constant dense<0.000000e+00> : vector<64xf32>
    %15 = vector.multi_reduction <add>, %14, %cst_10 [0] : vector<50x64xf32> to vector<64xf32>
    %16 = vector.shape_cast %15 : vector<64xf32> to vector<1x64xf32>
    %c0_11 = arith.constant 0 : index
    %c0_12 = arith.constant 0 : index
    %17 = vector.load %arg3[%c0_11, %c0_12] : memref<64x64xf32, #tpu.memory_space<vmem>>, vector<64x64xf32>
    %cst_13 = arith.constant dense<0.000000e+00> : vector<1x64xf32>
    %18 = tpu.matmul %16, %17, %cst_13 {dimension_numbers = #tpu.dot_dimension_numbers<[1], [0], [0], [1], [0, 0, 1, 1], [], []>} : vector<1x64xf32>, vector<64x64xf32>, vector<1x64xf32> -> vector<1x64xf32>
    %cst_14 = arith.constant 7.812500e-03 : f32
    %19 = vector.broadcast %cst_14 : f32 to vector<1x64xf32>
    %20 = arith.mulf %18, %19 : vector<1x64xf32>
    %21 = vector.broadcast %10 : vector<1x64xf32> to vector<50x64xf32>
    %22 = arith.subf %2, %21 : vector<50x64xf32>
    %cst_15 = arith.constant 9.99999974E-6 : f32
    %23 = vector.broadcast %cst_15 : f32 to vector<1x64xf32>
    %24 = arith.addf %20, %23 : vector<1x64xf32>
    %25 = math.rsqrt %24 : vector<1x64xf32>
    %26 = vector.broadcast %25 : vector<1x64xf32> to vector<50x64xf32>
    %27 = arith.mulf %22, %26 : vector<50x64xf32>
    %c0_16 = arith.constant 0 : index
    %c0_17 = arith.constant 0 : index
    %28 = vector.load %arg4[%c0_16, %c0_17] : memref<1x64xf32, #tpu.memory_space<vmem>>, vector<1x64xf32>
    %29 = vector.broadcast %28 : vector<1x64xf32> to vector<50x64xf32>
    %30 = arith.mulf %27, %29 : vector<50x64xf32>
    %c0_18 = arith.constant 0 : index
    %c0_19 = arith.constant 0 : index
    %31 = vector.load %arg5[%c0_18, %c0_19] : memref<1x64xf32, #tpu.memory_space<vmem>>, vector<1x64xf32>
    %32 = vector.broadcast %31 : vector<1x64xf32> to vector<50x64xf32>
    %33 = arith.addf %30, %32 : vector<50x64xf32>
    %cst_20 = arith.constant 0.000000e+00 : f32
    %34 = vector.broadcast %cst_20 : f32 to vector<50x64xf32>
    %35 = arith.maximumf %33, %34 : vector<50x64xf32>
    %36 = arith.truncf %35 : vector<50x64xf32> to vector<50x64xbf16>
    %c0_21 = arith.constant 0 : index
    %c0_22 = arith.constant 0 : index
    %37 = vector.load %arg6[%c0_21, %c0_22] : memref<50x64xbf16, #tpu.memory_space<vmem>>, vector<50x64xbf16>
    tpu.vector_store %arg6[%c0_21, %c0_22], %36 {strides = array<i32>} : memref<50x64xbf16, #tpu.memory_space<vmem>>, vector<50x64xbf16>,
    return
  }
}

module attributes {stable_mosaic.version = 11 : i64} {
  func.func @convt_tanh_kernel(%arg0: memref<162x64xbf16, #tpu.memory_space<vmem>>, %arg1: memref<64x12xbf16, #tpu.memory_space<vmem>>, %arg2: memref<1x12xf32, #tpu.memory_space<vmem>>, %arg3: memref<162x12xf32, #tpu.memory_space<vmem>>) attributes {dimension_semantics = [], scalar_prefetch = 0 : i64, scratch_operands = 0 : i64, tpu.core_type = #tpu.core_type<tc>} {
    %c0 = arith.constant 0 : index
    %c0_0 = arith.constant 0 : index
    %0 = vector.load %arg0[%c0, %c0_0] : memref<162x64xbf16, #tpu.memory_space<vmem>>, vector<162x64xbf16>
    %c0_1 = arith.constant 0 : index
    %c0_2 = arith.constant 0 : index
    %1 = vector.load %arg1[%c0_1, %c0_2] : memref<64x12xbf16, #tpu.memory_space<vmem>>, vector<64x12xbf16>
    %cst = arith.constant dense<0.000000e+00> : vector<162x12xf32>
    %2 = tpu.matmul %0, %1, %cst {dimension_numbers = #tpu.dot_dimension_numbers<[1], [0], [0], [1], [0, 0, 1, 1], [], []>} : vector<162x64xbf16>, vector<64x12xbf16>, vector<162x12xf32> -> vector<162x12xf32>
    %c0_3 = arith.constant 0 : index
    %c0_4 = arith.constant 0 : index
    %3 = vector.load %arg2[%c0_3, %c0_4] : memref<1x12xf32, #tpu.memory_space<vmem>>, vector<1x12xf32>
    %4 = vector.broadcast %3 : vector<1x12xf32> to vector<162x12xf32>
    %5 = arith.addf %2, %4 : vector<162x12xf32>
    %6 = math.tanh %5 : vector<162x12xf32>
    %c0_5 = arith.constant 0 : index
    %c0_6 = arith.constant 0 : index
    %7 = vector.load %arg3[%c0_5, %c0_6] : memref<162x12xf32, #tpu.memory_space<vmem>>, vector<162x12xf32>
    tpu.vector_store %arg3[%c0_5, %c0_6], %6 {strides = array<i32>} : memref<162x12xf32, #tpu.memory_space<vmem>>, vector<162x12xf32>,
    return
  }
}

</mosaic_0001>

<llo_original>
// kernel: tile.7
$region0: #{tile.7}
  %s0 = inlined_call_operand.vmem [shape: f32[2,25,64], index: 0, kind: input, shape index: {}]
  %s1 = inlined_call_operand.vmem [shape: f32[50,64], index: 1, kind: output, shape index: {}]
  %v2 = vld [vmem:[%s0] sm:$0xff]
  %vm3 = vcmask 523264
  %4 = vst.msk [vmem:[%s1] sm:$0xff] %vm3, %v2
  %s5 = scalar_lea.vmem %s0, 8
  %v6 = vld [vmem:[%s5] sm:$0xff]
  %vm7 = vcmask 523264
  %s8 = scalar_lea.vmem %s1, 8
  %9 = vst.msk [vmem:[%s8] sm:$0xff] %vm7, %v6
  %s10 = scalar_lea.vmem %s0, 16
  %v11 = vld [vmem:[%s10] sm:$0xff]
  %vm12 = vcmask 523264
  %s13 = scalar_lea.vmem %s1, 16
  %14 = vst.msk [vmem:[%s13] sm:$0xff] %vm12, %v11
  %s15 = scalar_lea.vmem %s0, 24
  %s16 = smov 3
  %v17 = vld [vmem:[%s15] ss:$8 sm:%s16]
  %vm18 = vcmask 523264
  %s19 = scalar_lea.vmem %s1, 24
  %20 = vst.msk [vmem:[%s19] sm:$0x3] %vm18, %v17
  %s21 = scalar_lea.vmem %s0, 33
  %v22 = vld [vmem:[%s21] sm:$0xff]
  %vm23 = vcmask 523264
  %s24 = scalar_lea.vmem %s1, 26
  %25 = vst.msk [vmem:[%s24] sm:$0xff] %vm23, %v22
  %s26 = scalar_lea.vmem %s0, 41
  %v27 = vld [vmem:[%s26] sm:$0xff]
  %vm28 = vcmask 523264
  %s29 = scalar_lea.vmem %s1, 34
  %30 = vst.msk [vmem:[%s29] sm:$0xff] %vm28, %v27
  %s31 = scalar_lea.vmem %s0, 49
  %v32 = vld [vmem:[%s31] sm:$0xff]
  %vm33 = vcmask 523264
  %s34 = scalar_lea.vmem %s1, 42
  %35 = vst.msk [vmem:[%s34] sm:$0xff] %vm33, %v32

// kernel: _forward_impl.3
$region0: #{_forward_impl.3}
  #allocation0 [shape = 'u32[]', space=smem, size = 0x4, offset = 0x4, fixed_abs, tag = 'smem constant byte address 0x4 - core index']
  #allocation1 [shape = 'u32[72,128]{1,0:T(1,128)}', space=vmem, size = 0x9000, scoped, tag = 'internal scratch']
  %s0 = inlined_call_operand.vmem [shape: bf16[2,16], index: 0, kind: input, shape index: {}]
  %s1 = inlined_call_operand.hbm [shape: bf16[16,512], index: 1, kind: input, shape index: {}]
  %s2 = inlined_call_operand.vmem [shape: f32[1,512], index: 2, kind: input, shape index: {}]
  %s3 = inlined_call_operand.vmem [shape: bf16[2,512], index: 3, kind: output, shape index: {}]
  %s4 = sld [smem:[#allocation0]]
  $region26: #{_forward_impl.3} parent=0
    _
  %s6 = ssub.s32 1, %s4
  %s7 = scalar_select 0, %s6, %s4
  $region1: #{_forward_impl.3} parent=0
    #allocation2 [shape = 'u8[16384]{0}', space=vmem, size = 0x4000, scoped, tag = 'input window, operand 1, single buffered']
    #allocation3 [shape = 's32[1]{0}', space=sflag, size = 0x4, scoped, tag = 'scoped memory for _forward_impl.3']
    %8 = vsyncpa [#allocation3], 0
    // Predicated region
    $region2: #{_forward_impl.3} parent=1 // pred_check
      _
    $region3: #{_forward_impl.3} parent=1 // pred_check_branch
      %10 = sbr.rel (0) target = $region5
    $region4: #{_forward_impl.3} parent=1 // pred_region
      _
    $region5: #{_forward_impl.3} parent=1 // pred_fallthru
      _
    // Predicated region
    $region6: #{_forward_impl.3} parent=1 // pred_check
      _
    $region7: #{_forward_impl.3} parent=1 // pred_check_branch
      %12 = sbr.rel (0) target = $region9
    $region8: #{_forward_impl.3} parent=1 // pred_region
      %14 = vsyncadd [#allocation3], 0
      %s15 = sshll.u32 %s1, 4
      %s16 = int_to_ptr.hbm [resolvable:$true] %s15
      %s17 = sshll.u32 [#allocation2], 4
      %s18 = int_to_ptr.vmem [resolvable:$true] %s17
      %23 = dma.hbm_to_vmem [thread:$0]  %s16, 512, %s18, [#allocation3], 256, 256, 16
    $region9: #{_forward_impl.3} parent=1 // pred_fallthru
      _
    // Predicated region
    $region10: #{_forward_impl.3} parent=1 // pred_check
      _
    $region11: #{_forward_impl.3} parent=1 // pred_check_branch
      %25 = sbr.rel (0) target = $region13
    $region12: #{_forward_impl.3} parent=1 // pred_region
      _
    $region13: #{_forward_impl.3} parent=1 // pred_fallthru
      _
    // Predicated region
    $region14: #{_forward_impl.3} parent=1 // pred_check
      _
    $region15: #{_forward_impl.3} parent=1 // pred_check_branch
      %27 = sbr.rel (0) target = $region17
    $region16: #{_forward_impl.3} parent=1 // pred_region
      %29 = dma.done [#allocation3], 512
    $region17: #{_forward_impl.3} parent=1 // pred_fallthru
      _
    %v31 = vld [vmem:[%s0] sm:$0x1]
    %v32 = vld [vmem:[#allocation2] sm:$0xff]
    %v33 = vld [vmem:[#allocation2 + $0x8] sm:$0xff]
    %v34 = vld [vmem:[#allocation2 + $0x10] sm:$0xff]
    %v35 = vld [vmem:[#allocation2 + $0x18] sm:$0xff]
    %v36 = vld [vmem:[%s2] sm:$0xf]
    %v38 = vperm.slane %v36, 0
    %v39 = vperm.slane %v36, 1
    %v40 = vperm.slane %v36, 2
    %v41 = vperm.slane %v36, 3
    %v50 = vunpack.c.l.b16 %v32
    %v51 = vunpack.c.h.b16 %v32
    %v52 = vunpack.c.l.b16 %v33
    %v53 = vunpack.c.h.b16 %v33
    %v54 = vunpack.c.l.b16 %v34
    %v55 = vunpack.c.h.b16 %v34
    %v56 = vunpack.c.l.b16 %v35
    %v57 = vunpack.c.h.b16 %v35
    %v58 = vpack.c.b16 %v54, %v50
    %v59 = vpack.c.b16 %v55, %v51
    %v60 = vpack.c.b16 %v56, %v52
    %v61 = vpack.c.b16 %v57, %v53
    %vm66 = vcmask 130048
    %v68 = vsel %vm66, %v31, 0
    %70 = vmatpush.bf16.msra.mxu0 0
    %71 = vmatpush.bf16.msra.mxu0 0
    %72 = vmatpush.bf16.msra.mxu0 0
    %73 = vmatpush.bf16.msra.mxu0 0
    %74 = vmatpush.bf16.msra.mxu0 0
    %75 = vmatpush.bf16.msra.mxu0 0
    %76 = vmatpush.bf16.msra.mxu0 0
    %77 = vmatpush.bf16.msra.mxu0 %v58
    %78 = vmatmul.bf16.gmra.mxu0 %v68
    %v79 = vpop.f32.mrf.mxu0
    %v80 = vadd.f32 %v38, %v79
    %v81 = vpop.f32.mrf.mxu0
    %82 = vdwg.mxu0
    %83 = vmatpush.bf16.msra.mxu0 0
    %84 = vmatpush.bf16.msra.mxu0 0
    %85 = vmatpush.bf16.msra.mxu0 0
    %86 = vmatpush.bf16.msra.mxu0 0
    %87 = vmatpush.bf16.msra.mxu0 0
    %88 = vmatpush.bf16.msra.mxu0 0
    %89 = vmatpush.bf16.msra.mxu0 0
    %90 = vmatpush.bf16.msra.mxu0 %v59
    %91 = vmatmul.bf16.gmra.mxu0 %v68
    %v92 = vpop.f32.mrf.mxu0
    %v93 = vadd.f32 %v39, %v92
    %v94 = vpop.f32.mrf.mxu0
    %95 = vdwg.mxu0
    %96 = vmatpush.bf16.msra.mxu0 0
    %97 = vmatpush.bf16.msra.mxu0 0
    %98 = vmatpush.bf16.msra.mxu0 0
    %99 = vmatpush.bf16.msra.mxu0 0
    %100 = vmatpush.bf16.msra.mxu0 0
    %101 = vmatpush.bf16.msra.mxu0 0
    %102 = vmatpush.bf16.msra.mxu0 0
    %103 = vmatpush.bf16.msra.mxu0 %v60
    %104 = vmatmul.bf16.gmra.mxu0 %v68
    %v105 = vpop.f32.mrf.mxu0
    %v106 = vadd.f32 %v40, %v105
    %v107 = vpop.f32.mrf.mxu0
    %108 = vdwg.mxu0
    %109 = vmatpush.bf16.msra.mxu0 0
    %110 = vmatpush.bf16.msra.mxu0 0
    %111 = vmatpush.bf16.msra.mxu0 0
    %112 = vmatpush.bf16.msra.mxu0 0
    %113 = vmatpush.bf16.msra.mxu0 0
    %114 = vmatpush.bf16.msra.mxu0 0
    %115 = vmatpush.bf16.msra.mxu0 0
    %116 = vmatpush.bf16.msra.mxu0 %v61
    %117 = vmatmul.bf16.gmra.mxu0 %v68
    %v118 = vpop.f32.mrf.mxu0
    %v119 = vadd.f32 %v41, %v118
    %v120 = vpop.f32.mrf.mxu0
    %121 = vdwg.mxu0
    %v122 = vmax.f32 %v80, 0.0
    %v123 = vmax.f32 %v93, 0.0
    %v124 = vmax.f32 %v106, 0.0
    %v125 = vmax.f32 %v119, 0.0
    %v126 = vpack.c.bf16 %v123, %v122
    %v127 = vpack.c.bf16 %v125, %v124
    %v130 = vrot.slane %v126, 3
    %v131 = vrot.slane %v127, 6
    %v132 = vrot.slane %v127, 1
    %vm133 = vcmask 1040384
    %v136 = vsel %vm133, %v126, %v130
    %vm137 = vcmask 1042434
    %v140 = vsel %vm137, %v131, %v132
    %vm141 = vcmask 1041408
    %v142 = vsel %vm141, %v136, %v140
    %144 = vst [vmem:[%s3] sm:$0xf] %v142
    // Predicated region
    $region18: #{_forward_impl.3} parent=1 // pred_check
      _
    $region19: #{_forward_impl.3} parent=1 // pred_check_branch
      %146 = sbr.rel (0) target = $region21
    $region20: #{_forward_impl.3} parent=1 // pred_region
      _
    $region21: #{_forward_impl.3} parent=1 // pred_fallthru
      _
    // Predicated region
    $region22: #{_forward_impl.3} parent=1 // pred_check
      _
    $region23: #{_forward_impl.3} parent=1 // pred_check_branch
      %148 = sbr.rel (0) target = $region25
    $region24: #{_forward_impl.3} parent=1 // pred_region
      _
    $region25: #{_forward_impl.3} parent=1 // pred_fallthru
      _
    %149 = vsyncpa [#allocation3], 1

// kernel: _forward_impl.4
$region0: #{_forward_impl.4}
  #allocation0 [shape = 'u32[]', space=smem, size = 0x4, offset = 0x4, fixed_abs, tag = 'smem constant byte address 0x4 - core index']
  #allocation1 [shape = 'u32[72,128]{1,0:T(1,128)}', space=vmem, size = 0x9000, scoped, tag = 'internal scratch']
  %s0 = inlined_call_operand.vmem [shape: bf16[50,128], index: 0, kind: input, shape index: {}]
  %s1 = inlined_call_operand.vmem [shape: bf16[128,64], index: 1, kind: input, shape index: {}]
  %s2 = inlined_call_operand.vmem [shape: f32[50,64], index: 2, kind: input, shape index: {}]
  %s3 = inlined_call_operand.vmem [shape: f32[64,64], index: 3, kind: input, shape index: {}]
  %s4 = inlined_call_operand.vmem [shape: f32[1,64], index: 4, kind: input, shape index: {}]
  %s5 = inlined_call_operand.vmem [shape: f32[1,64], index: 5, kind: input, shape index: {}]
  %s6 = inlined_call_operand.vmem [shape: bf16[50,64], index: 6, kind: output, shape index: {}]
  %s7 = sld [smem:[#allocation0]]
  $region34: #{_forward_impl.4} parent=0
    _
  %s9 = ssub.s32 1, %s7
  %s10 = scalar_select 0, %s9, %s7
  // Predicated region
  $region2: #{_forward_impl.4} parent=0 // pred_check
    _
  $region3: #{_forward_impl.4} parent=0 // pred_check_branch
    %12 = sbr.rel (0) target = $region5
  $region4: #{_forward_impl.4} parent=0 // pred_region
    _
  $region5: #{_forward_impl.4} parent=0 // pred_fallthru
    _
  // Predicated region
  $region6: #{_forward_impl.4} parent=0 // pred_check
    _
  $region7: #{_forward_impl.4} parent=0 // pred_check_branch
    %14 = sbr.rel (0) target = $region9
  $region8: #{_forward_impl.4} parent=0 // pred_region
    _
  $region9: #{_forward_impl.4} parent=0 // pred_fallthru
    _
  // Predicated region
  $region10: #{_forward_impl.4} parent=0 // pred_check
    _
  $region11: #{_forward_impl.4} parent=0 // pred_check_branch
    %16 = sbr.rel (0) target = $region13
  $region12: #{_forward_impl.4} parent=0 // pred_region
    _
  $region13: #{_forward_impl.4} parent=0 // pred_fallthru
    _
  // Predicated region
  $region14: #{_forward_impl.4} parent=0 // pred_check
    _
  $region15: #{_forward_impl.4} parent=0 // pred_check_branch
    %18 = sbr.rel (0) target = $region17
  $region16: #{_forward_impl.4} parent=0 // pred_region
    _
  $region17: #{_forward_impl.4} parent=0 // pred_fallthru
    _
  // Predicated region
  $region18: #{_forward_impl.4} parent=0 // pred_check
    _
  $region19: #{_forward_impl.4} parent=0 // pred_check_branch
    %20 = sbr.rel (0) target = $region21
  $region20: #{_forward_impl.4} parent=0 // pred_region
    _
  $region21: #{_forward_impl.4} parent=0 // pred_fallthru
    _
  // Predicated region
  $region22: #{_forward_impl.4} parent=0 // pred_check
    _
  $region23: #{_forward_impl.4} parent=0 // pred_check_branch
    %22 = sbr.rel (0) target = $region25
  $region24: #{_forward_impl.4} parent=0 // pred_region
    _
  $region25: #{_forward_impl.4} parent=0 // pred_fallthru
    _
  %v23 = vld [vmem:[%s0] sm:$0xf]
  %v24 = vld [vmem:[%s0 + $0x4] sm:$0xf]
  %v25 = vld [vmem:[%s0 + $0x8] sm:$0xf]
  %v26 = vld [vmem:[%s0 + $0xc] sm:$0xf]
  %v27 = vld [vmem:[%s0 + $0x10] sm:$0xf]
  %v28 = vld [vmem:[%s0 + $0x14] sm:$0xf]
  %v29 = vld [vmem:[%s0 + $0x18] sm:$0x1]
  %v30 = vld [vmem:[%s1] sm:$0xf]
  %v31 = vld [vmem:[%s1 + $0x4] sm:$0xf]
  %v32 = vld [vmem:[%s1 + $0x8] sm:$0xf]
  %v33 = vld [vmem:[%s1 + $0xc] sm:$0xf]
  %v34 = vld [vmem:[%s1 + $0x10] sm:$0xf]
  %v35 = vld [vmem:[%s1 + $0x14] sm:$0xf]
  %v36 = vld [vmem:[%s1 + $0x18] sm:$0xf]
  %v37 = vld [vmem:[%s1 + $0x1c] sm:$0xf]
  %v38 = vld [vmem:[%s1 + $0x20] sm:$0xf]
  %v39 = vld [vmem:[%s1 + $0x24] sm:$0xf]
  %v40 = vld [vmem:[%s1 + $0x28] sm:$0xf]
  %v41 = vld [vmem:[%s1 + $0x2c] sm:$0xf]
  %v42 = vld [vmem:[%s1 + $0x30] sm:$0xf]
  %v43 = vld [vmem:[%s1 + $0x34] sm:$0xf]
  %v44 = vld [vmem:[%s1 + $0x38] sm:$0xf]
  %v45 = vld [vmem:[%s1 + $0x3c] sm:$0xf]
  %v53 = vunpack.c.l.b16 %v23
  %v54 = vunpack.c.l.b16 %v24
  %v55 = vunpack.c.l.b16 %v25
  %v56 = vunpack.c.l.b16 %v26
  %v57 = vunpack.c.l.b16 %v27
  %v58 = vunpack.c.l.b16 %v28
  %v59 = vunpack.c.l.b16 %v29
  %v60 = vpack.c.b16 %v54, %v53
  %v61 = vpack.c.b16 %v56, %v55
  %v62 = vpack.c.b16 %v58, %v57
  %v63 = vpack.c.b16 %v59, %v59
  %v84 = vunpack.c.l.b16 %v30
  %v85 = vunpack.c.l.b16 %v31
  %v86 = vunpack.c.l.b16 %v32
  %v87 = vunpack.c.l.b16 %v33
  %v88 = vunpack.c.l.b16 %v34
  %v89 = vunpack.c.l.b16 %v35
  %v90 = vunpack.c.l.b16 %v36
  %v91 = vunpack.c.l.b16 %v37
  %v92 = vunpack.c.l.b16 %v38
  %v93 = vunpack.c.l.b16 %v39
  %v94 = vunpack.c.l.b16 %v40
  %v95 = vunpack.c.l.b16 %v41
  %v96 = vunpack.c.l.b16 %v42
  %v97 = vunpack.c.l.b16 %v43
  %v98 = vunpack.c.l.b16 %v44
  %v99 = vunpack.c.l.b16 %v45
  %v100 = vpack.c.b16 %v85, %v84
  %v101 = vpack.c.b16 %v87, %v86
  %v102 = vpack.c.b16 %v89, %v88
  %v103 = vpack.c.b16 %v91, %v90
  %v104 = vpack.c.b16 %v93, %v92
  %v105 = vpack.c.b16 %v95, %v94
  %v106 = vpack.c.b16 %v97, %v96
  %v107 = vpack.c.b16 %v99, %v98
  %116 = vmatpush.bf16.msra.mxu0 %v107
  %117 = vmatpush.bf16.msra.mxu0 %v106
  %118 = vmatpush.bf16.msra.mxu0 %v105
  %119 = vmatpush.bf16.msra.mxu0 %v104
  %120 = vmatpush.bf16.msra.mxu0 %v103
  %121 = vmatpush.bf16.msra.mxu0 %v102
  %122 = vmatpush.bf16.msra.mxu0 %v101
  %123 = vmatpush.bf16.msra.mxu0 %v100
  %124 = vmatmul.bf16.gmra.mxu0 %v60
  %v125 = vpop.f32.mrf.mxu0
  %v126 = vadd.f32 0.0, %v125
  %v127 = vpop.f32.mrf.mxu0
  %v128 = vadd.f32 0.0, %v127
  %129 = vmatmul.bf16.gmra.mxu0 %v61
  %v130 = vpop.f32.mrf.mxu0
  %v131 = vadd.f32 0.0, %v130
  %v132 = vpop.f32.mrf.mxu0
  %v133 = vadd.f32 0.0, %v132
  %134 = vmatmul.bf16.gmra.mxu0 %v62
  %v135 = vpop.f32.mrf.mxu0
  %v136 = vadd.f32 0.0, %v135
  %v137 = vpop.f32.mrf.mxu0
  %v138 = vadd.f32 0.0, %v137
  %139 = vmatmul.bf16.gmra.mxu0 %v63
  %v140 = vpop.f32.mrf.mxu0
  %v141 = vadd.f32 0.0, %v140
  %v142 = vpop.f32.mrf.mxu0
  %143 = vdwg.mxu0
  %v144 = vld [vmem:[%s2] sm:$0xff]
  %v145 = vld [vmem:[%s2 + $0x8] sm:$0xff]
  %v146 = vld [vmem:[%s2 + $0x10] sm:$0xff]
  %v147 = vld [vmem:[%s2 + $0x18] sm:$0xff]
  %v148 = vld [vmem:[%s2 + $0x20] sm:$0xff]
  %v149 = vld [vmem:[%s2 + $0x28] sm:$0xff]
  %v150 = vld [vmem:[%s2 + $0x30] sm:$0x3]
  %v151 = vmul.f32 %v126, %v144
  %v152 = vmul.f32 %v128, %v145
  %v153 = vmul.f32 %v131, %v146
  %v154 = vmul.f32 %v133, %v147
  %v155 = vmul.f32 %v136, %v148
  %v156 = vmul.f32 %v138, %v149
  %v157 = vmul.f32 %v141, %v150
  %vm158 = vcmask 523264
  %v159 = vsel %vm158, %v151, 0.0
  %v160 = vsel %vm158, %v152, 0.0
  %v161 = vadd.f32 %v159, %v160
  %v162 = vsel %vm158, %v153, 0.0
  %v163 = vadd.f32 %v161, %v162
  %v164 = vsel %vm158, %v154, 0.0
  %v165 = vadd.f32 %v163, %v164
  %v166 = vsel %vm158, %v155, 0.0
  %v167 = vadd.f32 %v165, %v166
  %v168 = vsel %vm158, %v156, 0.0
  %v169 = vadd.f32 %v167, %v168
  %vm170 = vcmask 517120
  %v171 = vsel %vm170, %v157, 0.0
  %v172 = vadd.f32 %v169, %v171
  %v173 = vrot.slane %v172, 4
  %v174 = vadd.f32 %v172, %v173
  %v175 = vrot.slane %v174, 2
  %v176 = vadd.f32 %v174, %v175
  %v177 = vrot.slane %v176, 1
  %v178 = vadd.f32 %v176, %v177
  %v179 = vld [vmem:[%s3] sm:$0xff]
  %v180 = vld [vmem:[%s3 + $0x8] sm:$0xff]
  %v181 = vld [vmem:[%s3 + $0x10] sm:$0xff]
  %v182 = vld [vmem:[%s3 + $0x18] sm:$0xff]
  %v183 = vld [vmem:[%s3 + $0x20] sm:$0xff]
  %v184 = vld [vmem:[%s3 + $0x28] sm:$0xff]
  %v185 = vld [vmem:[%s3 + $0x30] sm:$0xff]
  %v186 = vld [vmem:[%s3 + $0x38] sm:$0xff]
  %v188 = vsel %vm158, %v178, 0
  %190 = vmatpush.msra.mxu0 0.0
  %191 = vmatpush.msra.mxu0 0.0
  %192 = vmatpush.msra.mxu0 0.0
  %193 = vmatpush.msra.mxu0 0.0
  %194 = vmatpush.msra.mxu0 0.0
  %195 = vmatpush.msra.mxu0 0.0
  %196 = vmatpush.msra.mxu0 0.0
  %197 = vmatpush.msra.mxu0 0.0
  %198 = vmatpush.msra.mxu0 %v186
  %199 = vmatpush.msra.mxu0 %v185
  %200 = vmatpush.msra.mxu0 %v184
  %201 = vmatpush.msra.mxu0 %v183
  %202 = vmatpush.msra.mxu0 %v182
  %203 = vmatpush.msra.mxu0 %v181
  %204 = vmatpush.msra.mxu0 %v180
  %205 = vmatpush.msra.mxu0 %v179
  %206 = vmatmul.f32.gmra.mxu0 %v188
  %v207 = vpop.f32.mrf.mxu0
  %v208 = vadd.f32 0.0, %v207
  %209 = vdwg.mxu0
  %v210 = vmul.f32 %v208, 0.0078125
  %v211 = vperm.slane %v210, 0
  %v212 = vsub.f32 %v126, %v211
  %v213 = vsub.f32 %v128, %v211
  %v214 = vsub.f32 %v131, %v211
  %v215 = vsub.f32 %v133, %v211
  %v216 = vsub.f32 %v136, %v211
  %v217 = vsub.f32 %v138, %v211
  %v218 = vsub.f32 %v141, %v211
  %v219 = vmul.f32 %v212, %v144
  %v220 = vmul.f32 %v213, %v145
  %v221 = vmul.f32 %v214, %v146
  %v222 = vmul.f32 %v215, %v147
  %v223 = vmul.f32 %v216, %v148
  %v224 = vmul.f32 %v217, %v149
  %v225 = vmul.f32 %v218, %v150
  %v226 = vmul.f32 %v219, %v219
  %v227 = vmul.f32 %v220, %v220
  %v228 = vmul.f32 %v221, %v221
  %v229 = vmul.f32 %v222, %v222
  %v230 = vmul.f32 %v223, %v223
  %v231 = vmul.f32 %v224, %v224
  %v232 = vmul.f32 %v225, %v225
  %v233 = vsel %vm158, %v226, 0.0
  %v234 = vsel %vm158, %v227, 0.0
  %v235 = vadd.f32 %v233, %v234
  %v236 = vsel %vm158, %v228, 0.0
  %v237 = vadd.f32 %v235, %v236
  %v238 = vsel %vm158, %v229, 0.0
  %v239 = vadd.f32 %v237, %v238
  %v240 = vsel %vm158, %v230, 0.0
  %v241 = vadd.f32 %v239, %v240
  %v242 = vsel %vm158, %v231, 0.0
  %v243 = vadd.f32 %v241, %v242
  %v244 = vsel %vm170, %v232, 0.0
  %v245 = vadd.f32 %v243, %v244
  %v246 = vrot.slane %v245, 4
  %v247 = vadd.f32 %v245, %v246
  %v248 = vrot.slane %v247, 2
  %v249 = vadd.f32 %v247, %v248
  %v250 = vrot.slane %v249, 1
  %v251 = vadd.f32 %v249, %v250
  %v253 = vsel %vm158, %v251, 0
  %255 = vmatpush.msra.mxu0 0.0
  %256 = vmatpush.msra.mxu0 0.0
  %257 = vmatpush.msra.mxu0 0.0
  %258 = vmatpush.msra.mxu0 0.0
  %259 = vmatpush.msra.mxu0 0.0
  %260 = vmatpush.msra.mxu0 0.0
  %261 = vmatpush.msra.mxu0 0.0
  %262 = vmatpush.msra.mxu0 0.0
  %263 = vmatpush.msra.mxu0 %v186
  %264 = vmatpush.msra.mxu0 %v185
  %265 = vmatpush.msra.mxu0 %v184
  %266 = vmatpush.msra.mxu0 %v183
  %267 = vmatpush.msra.mxu0 %v182
  %268 = vmatpush.msra.mxu0 %v181
  %269 = vmatpush.msra.mxu0 %v180
  %270 = vmatpush.msra.mxu0 %v179
  %271 = vmatmul.f32.gmra.mxu0 %v253
  %v272 = vpop.f32.mrf.mxu0
  %v273 = vadd.f32 0.0, %v272
  %274 = vdwg.mxu0
  %v275 = vmul.f32 %v273, 0.0078125
  %v276 = vadd.f32 %v275, 1e-05
  %v277 = vrsqrt.pop %v276
  %v278 = vmul.f32 %v277, %v276
  %v279 = vmul.f32 %v278, %v277
  %v280 = vmul.f32 0.5, %v279
  %v281 = vsub.f32 1.5, %v280
  %v282 = vmul.f32 %v277, %v281
  %vm283 = vweird.f32 %v276
  %vm284 = vweird.f32 %v277
  %vm285 = vmor %vm283, %vm284
  %v286 = vsel %vm285, %v277, %v282
  %v287 = vperm.slane %v286, 0
  %v288 = vmul.f32 %v212, %v287
  %v289 = vmul.f32 %v213, %v287
  %v290 = vmul.f32 %v214, %v287
  %v291 = vmul.f32 %v215, %v287
  %v292 = vmul.f32 %v216, %v287
  %v293 = vmul.f32 %v217, %v287
  %v294 = vmul.f32 %v218, %v287
  %v295 = vld [vmem:[%s4] sm:$0x1]
  %v297 = vperm.slane %v295, 0
  %v299 = vmul.f32 %v288, %v297
  %v300 = vmul.f32 %v289, %v297
  %v301 = vmul.f32 %v290, %v297
  %v302 = vmul.f32 %v291, %v297
  %v303 = vmul.f32 %v292, %v297
  %v304 = vmul.f32 %v293, %v297
  %v305 = vmul.f32 %v294, %v297
  %v306 = vld [vmem:[%s5] sm:$0x1]
  %v308 = vperm.slane %v306, 0
  %v310 = vadd.f32 %v299, %v308
  %v311 = vadd.f32 %v300, %v308
  %v312 = vadd.f32 %v301, %v308
  %v313 = vadd.f32 %v302, %v308
  %v314 = vadd.f32 %v303, %v308
  %v315 = vadd.f32 %v304, %v308
  %v316 = vadd.f32 %v305, %v308
  %v317 = vmax.f32 %v310, 0.0
  %v318 = vmax.f32 %v311, 0.0
  %v319 = vmax.f32 %v312, 0.0
  %v320 = vmax.f32 %v313, 0.0
  %v321 = vmax.f32 %v314, 0.0
  %v322 = vmax.f32 %v315, 0.0
  %v323 = vmax.f32 %v316, 0.0
  %v324 = vpack.c.bf16 %v317, %v317
  %v325 = vpack.c.bf16 %v318, %v318
  %v326 = vpack.c.bf16 %v319, %v319
  %v327 = vpack.c.bf16 %v320, %v320
  %v328 = vpack.c.bf16 %v321, %v321
  %v329 = vpack.c.bf16 %v322, %v322
  %v330 = vpack.c.bf16 %v323, %v323
  %vm331 = vcmask 519168
  %332 = vst.msk [vmem:[%s6] sm:$0xf] %vm331, %v324
  %333 = vst.msk [vmem:[%s6 + $0x4] sm:$0xf] %vm331, %v325
  %334 = vst.msk [vmem:[%s6 + $0x8] sm:$0xf] %vm331, %v326
  %335 = vst.msk [vmem:[%s6 + $0xc] sm:$0xf] %vm331, %v327
  %336 = vst.msk [vmem:[%s6 + $0x10] sm:$0xf] %vm331, %v328
  %337 = vst.msk [vmem:[%s6 + $0x14] sm:$0xf] %vm331, %v329
  %vm338 = vcmask 516096
  %339 = vst.msk [vmem:[%s6 + $0x18] sm:$0x1] %vm338, %v330
  // Predicated region
  $region26: #{_forward_impl.4} parent=0 // pred_check
    _
  $region27: #{_forward_impl.4} parent=0 // pred_check_branch
    %341 = sbr.rel (0) target = $region29
  $region28: #{_forward_impl.4} parent=0 // pred_region
    _
  $region29: #{_forward_impl.4} parent=0 // pred_fallthru
    _
  // Predicated region
  $region30: #{_forward_impl.4} parent=0 // pred_check
    _
  $region31: #{_forward_impl.4} parent=0 // pred_check_branch
    %343 = sbr.rel (0) target = $region33
  $region32: #{_forward_impl.4} parent=0 // pred_region
    _
  $region33: #{_forward_impl.4} parent=0 // pred_fallthru
    _

// kernel: _forward_impl.5
$region0: #{_forward_impl.5}
  #allocation0 [shape = 'u32[]', space=smem, size = 0x4, offset = 0x4, fixed_abs, tag = 'smem constant byte address 0x4 - core index']
  #allocation1 [shape = 'u32[72,128]{1,0:T(1,128)}', space=vmem, size = 0x9000, scoped, tag = 'internal scratch']
  %s0 = inlined_call_operand.vmem [shape: bf16[162,64], index: 0, kind: input, shape index: {}]
  %s1 = inlined_call_operand.vmem [shape: bf16[64,12], index: 1, kind: input, shape index: {}]
  %s2 = inlined_call_operand.vmem [shape: f32[1,12], index: 2, kind: input, shape index: {}]
  %s3 = inlined_call_operand.vmem [shape: f32[162,12], index: 3, kind: output, shape index: {}]
  %s4 = sld [smem:[#allocation0]]
  $region22: #{_forward_impl.5} parent=0
    _
  %s6 = ssub.s32 1, %s4
  %s7 = scalar_select 0, %s6, %s4
  // Predicated region
  $region2: #{_forward_impl.5} parent=0 // pred_check
    _
  $region3: #{_forward_impl.5} parent=0 // pred_check_branch
    %9 = sbr.rel (0) target = $region5
  $region4: #{_forward_impl.5} parent=0 // pred_region
    _
  $region5: #{_forward_impl.5} parent=0 // pred_fallthru
    _
  // Predicated region
  $region6: #{_forward_impl.5} parent=0 // pred_check
    _
  $region7: #{_forward_impl.5} parent=0 // pred_check_branch
    %11 = sbr.rel (0) target = $region9
  $region8: #{_forward_impl.5} parent=0 // pred_region
    _
  $region9: #{_forward_impl.5} parent=0 // pred_fallthru
    _
  // Predicated region
  $region10: #{_forward_impl.5} parent=0 // pred_check
    _
  $region11: #{_forward_impl.5} parent=0 // pred_check_branch
    %13 = sbr.rel (0) target = $region13
  $region12: #{_forward_impl.5} parent=0 // pred_region
    _
  $region13: #{_forward_impl.5} parent=0 // pred_fallthru
    _
  %v15 = vld [vmem:[%s0] sm:$0xf]
  %v16 = vld [vmem:[%s0 + $0x4] sm:$0xf]
  %v17 = vld [vmem:[%s0 + $0x8] sm:$0xf]
  %v18 = vld [vmem:[%s0 + $0xc] sm:$0xf]
  %v19 = vld [vmem:[%s0 + $0x10] sm:$0xf]
  %v20 = vld [vmem:[%s0 + $0x14] sm:$0xf]
  %v21 = vld [vmem:[%s0 + $0x18] sm:$0xf]
  %v22 = vld [vmem:[%s0 + $0x1c] sm:$0xf]
  %v23 = vld [vmem:[%s0 + $0x20] sm:$0xf]
  %v24 = vld [vmem:[%s0 + $0x24] sm:$0xf]
  %v25 = vld [vmem:[%s0 + $0x28] sm:$0xf]
  %v26 = vld [vmem:[%s0 + $0x2c] sm:$0xf]
  %v27 = vld [vmem:[%s0 + $0x30] sm:$0xf]
  %v28 = vld [vmem:[%s0 + $0x34] sm:$0xf]
  %v29 = vld [vmem:[%s0 + $0x38] sm:$0xf]
  %v30 = vld [vmem:[%s0 + $0x3c] sm:$0xf]
  %v31 = vld [vmem:[%s0 + $0x40] sm:$0xf]
  %v32 = vld [vmem:[%s0 + $0x44] sm:$0xf]
  %v33 = vld [vmem:[%s0 + $0x48] sm:$0xf]
  %v34 = vld [vmem:[%s0 + $0x4c] sm:$0xf]
  %v35 = vld [vmem:[%s0 + $0x50] sm:$0x1]
  %v36 = vld [vmem:[%s1] sm:$0xf]
  %v37 = vld [vmem:[%s1 + $0x4] sm:$0xf]
  %v38 = vld [vmem:[%s1 + $0x8] sm:$0xf]
  %v39 = vld [vmem:[%s1 + $0xc] sm:$0xf]
  %v40 = vld [vmem:[%s1 + $0x10] sm:$0xf]
  %v41 = vld [vmem:[%s1 + $0x14] sm:$0xf]
  %v42 = vld [vmem:[%s1 + $0x18] sm:$0xf]
  %v43 = vld [vmem:[%s1 + $0x1c] sm:$0xf]
  %v44 = vld [vmem:[%s2] sm:$0x1]
  %v46 = vperm.slane %v44, 0
  %v69 = vunpack.c.l.b16 %v15
  %v70 = vunpack.c.l.b16 %v16
  %v71 = vunpack.c.l.b16 %v17
  %v72 = vunpack.c.l.b16 %v18
  %v73 = vunpack.c.l.b16 %v19
  %v74 = vunpack.c.l.b16 %v20
  %v75 = vunpack.c.l.b16 %v21
  %v76 = vunpack.c.l.b16 %v22
  %v77 = vunpack.c.l.b16 %v23
  %v78 = vunpack.c.l.b16 %v24
  %v79 = vunpack.c.l.b16 %v25
  %v80 = vunpack.c.l.b16 %v26
  %v81 = vunpack.c.l.b16 %v27
  %v82 = vunpack.c.l.b16 %v28
  %v83 = vunpack.c.l.b16 %v29
  %v84 = vunpack.c.l.b16 %v30
  %v85 = vunpack.c.l.b16 %v31
  %v86 = vunpack.c.l.b16 %v32
  %v87 = vunpack.c.l.b16 %v33
  %v88 = vunpack.c.l.b16 %v34
  %v89 = vunpack.c.l.b16 %v35
  %v90 = vpack.c.b16 %v70, %v69
  %v91 = vpack.c.b16 %v72, %v71
  %v92 = vpack.c.b16 %v74, %v73
  %v93 = vpack.c.b16 %v76, %v75
  %v94 = vpack.c.b16 %v78, %v77
  %v95 = vpack.c.b16 %v80, %v79
  %v96 = vpack.c.b16 %v82, %v81
  %v97 = vpack.c.b16 %v84, %v83
  %v98 = vpack.c.b16 %v86, %v85
  %v99 = vpack.c.b16 %v88, %v87
  %v100 = vpack.c.b16 %v89, %v89
  %v109 = vunpack.c.l.b16 %v36
  %v110 = vunpack.c.l.b16 %v37
  %v111 = vunpack.c.l.b16 %v38
  %v112 = vunpack.c.l.b16 %v39
  %v113 = vunpack.c.l.b16 %v40
  %v114 = vunpack.c.l.b16 %v41
  %v115 = vunpack.c.l.b16 %v42
  %v116 = vunpack.c.l.b16 %v43
  %v117 = vpack.c.b16 %v110, %v109
  %v118 = vpack.c.b16 %v112, %v111
  %v119 = vpack.c.b16 %v114, %v113
  %v120 = vpack.c.b16 %v116, %v115
  %vm125 = vcmask 523264
  %v127 = vsel %vm125, %v90, 0
  %v130 = vsel %vm125, %v91, 0
  %v133 = vsel %vm125, %v92, 0
  %v136 = vsel %vm125, %v93, 0
  %v139 = vsel %vm125, %v94, 0
  %v142 = vsel %vm125, %v95, 0
  %v145 = vsel %vm125, %v96, 0
  %v148 = vsel %vm125, %v97, 0
  %v151 = vsel %vm125, %v98, 0
  %v154 = vsel %vm125, %v99, 0
  %v157 = vsel %vm125, %v100, 0
  %159 = vmatpush.bf16.msra.mxu0 0
  %160 = vmatpush.bf16.msra.mxu0 0
  %161 = vmatpush.bf16.msra.mxu0 0
  %162 = vmatpush.bf16.msra.mxu0 0
  %163 = vmatpush.bf16.msra.mxu0 %v120
  %164 = vmatpush.bf16.msra.mxu0 %v119
  %165 = vmatpush.bf16.msra.mxu0 %v118
  %166 = vmatpush.bf16.msra.mxu0 %v117
  %167 = vmatmul.bf16.gmra.mxu0 %v127
  %v168 = vpop.f32.mrf.mxu0
  %v169 = vadd.f32 %v46, %v168
  %v170 = vpop.f32.mrf.mxu0
  %v171 = vadd.f32 %v46, %v170
  %172 = vmatmul.bf16.gmra.mxu0 %v130
  %v173 = vpop.f32.mrf.mxu0
  %v174 = vadd.f32 %v46, %v173
  %v175 = vpop.f32.mrf.mxu0
  %v176 = vadd.f32 %v46, %v175
  %177 = vmatmul.bf16.gmra.mxu0 %v133
  %v178 = vpop.f32.mrf.mxu0
  %v179 = vadd.f32 %v46, %v178
  %v180 = vpop.f32.mrf.mxu0
  %v181 = vadd.f32 %v46, %v180
  %182 = vmatmul.bf16.gmra.mxu0 %v136
  %v183 = vpop.f32.mrf.mxu0
  %v184 = vadd.f32 %v46, %v183
  %v185 = vpop.f32.mrf.mxu0
  %v186 = vadd.f32 %v46, %v185
  %187 = vmatmul.bf16.gmra.mxu0 %v139
  %v188 = vpop.f32.mrf.mxu0
  %v189 = vadd.f32 %v46, %v188
  %v190 = vpop.f32.mrf.mxu0
  %v191 = vadd.f32 %v46, %v190
  %192 = vmatmul.bf16.gmra.mxu0 %v142
  %v193 = vpop.f32.mrf.mxu0
  %v194 = vadd.f32 %v46, %v193
  %v195 = vpop.f32.mrf.mxu0
  %v196 = vadd.f32 %v46, %v195
  %197 = vmatmul.bf16.gmra.mxu0 %v145
  %v198 = vpop.f32.mrf.mxu0
  %v199 = vadd.f32 %v46, %v198
  %v200 = vpop.f32.mrf.mxu0
  %v201 = vadd.f32 %v46, %v200
  %202 = vmatmul.bf16.gmra.mxu0 %v148
  %v203 = vpop.f32.mrf.mxu0
  %v204 = vadd.f32 %v46, %v203
  %v205 = vpop.f32.mrf.mxu0
  %v206 = vadd.f32 %v46, %v205
  %207 = vmatmul.bf16.gmra.mxu0 %v151
  %v208 = vpop.f32.mrf.mxu0
  %v209 = vadd.f32 %v46, %v208
  %v210 = vpop.f32.mrf.mxu0
  %v211 = vadd.f32 %v46, %v210
  %212 = vmatmul.bf16.gmra.mxu0 %v154
  %v213 = vpop.f32.mrf.mxu0
  %v214 = vadd.f32 %v46, %v213
  %v215 = vpop.f32.mrf.mxu0
  %v216 = vadd.f32 %v46, %v215
  %217 = vmatmul.bf16.gmra.mxu0 %v157
  %v218 = vpop.f32.mrf.mxu0
  %v219 = vadd.f32 %v46, %v218
  %v220 = vpop.f32.mrf.mxu0
  %221 = vdwg.mxu0
  %v222 = vtanh.pop %v169
  %v223 = vtanh.pop %v171
  %v224 = vtanh.pop %v174
  %v225 = vtanh.pop %v176
  %v226 = vtanh.pop %v179
  %v227 = vtanh.pop %v181
  %v228 = vtanh.pop %v184
  %v229 = vtanh.pop %v186
  %v230 = vtanh.pop %v189
  %v231 = vtanh.pop %v191
  %v232 = vtanh.pop %v194
  %v233 = vtanh.pop %v196
  %v234 = vtanh.pop %v199
  %v235 = vtanh.pop %v201
  %v236 = vtanh.pop %v204
  %v237 = vtanh.pop %v206
  %v238 = vtanh.pop %v209
  %v239 = vtanh.pop %v211
  %v240 = vtanh.pop %v214
  %v241 = vtanh.pop %v216
  %v242 = vtanh.pop %v219
  %vm243 = vcmask 97280
  %244 = vst.msk [vmem:[%s3] sm:$0xff] %vm243, %v222
  %245 = vst.msk [vmem:[%s3 + $0x8] sm:$0xff] %vm243, %v223
  %246 = vst.msk [vmem:[%s3 + $0x10] sm:$0xff] %vm243, %v224
  %247 = vst.msk [vmem:[%s3 + $0x18] sm:$0xff] %vm243, %v225
  %248 = vst.msk [vmem:[%s3 + $0x20] sm:$0xff] %vm243, %v226
  %249 = vst.msk [vmem:[%s3 + $0x28] sm:$0xff] %vm243, %v227
  %250 = vst.msk [vmem:[%s3 + $0x30] sm:$0xff] %vm243, %v228
  %251 = vst.msk [vmem:[%s3 + $0x38] sm:$0xff] %vm243, %v229
  %252 = vst.msk [vmem:[%s3 + $0x40] sm:$0xff] %vm243, %v230
  %253 = vst.msk [vmem:[%s3 + $0x48] sm:$0xff] %vm243, %v231
  %254 = vst.msk [vmem:[%s3 + $0x50] sm:$0xff] %vm243, %v232
  %255 = vst.msk [vmem:[%s3 + $0x58] sm:$0xff] %vm243, %v233
  %256 = vst.msk [vmem:[%s3 + $0x60] sm:$0xff] %vm243, %v234
  %257 = vst.msk [vmem:[%s3 + $0x68] sm:$0xff] %vm243, %v235
  %258 = vst.msk [vmem:[%s3 + $0x70] sm:$0xff] %vm243, %v236
  %259 = vst.msk [vmem:[%s3 + $0x78] sm:$0xff] %vm243, %v237
  %260 = vst.msk [vmem:[%s3 + $0x80] sm:$0xff] %vm243, %v238
  %261 = vst.msk [vmem:[%s3 + $0x88] sm:$0xff] %vm243, %v239
  %262 = vst.msk [vmem:[%s3 + $0x90] sm:$0xff] %vm243, %v240
  %263 = vst.msk [vmem:[%s3 + $0x98] sm:$0xff] %vm243, %v241
  %vm264 = vcmask 91136
  %265 = vst.msk [vmem:[%s3 + $0xa0] sm:$0x3] %vm264, %v242
  // Predicated region
  $region14: #{_forward_impl.5} parent=0 // pred_check
    _
  $region15: #{_forward_impl.5} parent=0 // pred_check_branch
    %267 = sbr.rel (0) target = $region17
  $region16: #{_forward_impl.5} parent=0 // pred_region
    _
  $region17: #{_forward_impl.5} parent=0 // pred_fallthru
    _
  // Predicated region
  $region18: #{_forward_impl.5} parent=0 // pred_check
    _
  $region19: #{_forward_impl.5} parent=0 // pred_check_branch
    %269 = sbr.rel (0) target = $region21
  $region20: #{_forward_impl.5} parent=0 // pred_region
    _
  $region21: #{_forward_impl.5} parent=0 // pred_fallthru
    _

</llo_original>
